<compile_context>
chip_gen: v6e
topology: v6e:2x2x1
jax: 0.10.0
libtpu: 0.0.40
codegen_flags: <defaults>
</compile_context>

<pallas_src>
import numpy as np
import jax
import jax.numpy as jnp
from jax.experimental import pallas as pl
from jax.experimental.pallas import tpu as pltpu

Q = 20           # the reference module always uses leggauss(20) regardless of num_locs
HALF_Q = Q // 2  # leggauss node symmetry: l_{Q-1-q} = -l_q, w_{Q-1-q} = w_q


def _gauss_legendre_sin_kernel(m_ref, d_ref, wh_ref, x_ref, o_ref):
    """out = sin(m*x) * sum_{q<10} wh_q * cos(d_q*x)
           == 0.5*(b-a) * sum_{q<20} w_q * sin(t_q*x)   (exact pairwise identity)."""
    x = x_ref[...]                                  # (TB, TN) f32 tile in VMEM
    s = jnp.sin(m_ref[0] * x)                       # single sin per element (EUP)
    acc = wh_ref[0] * jnp.cos(d_ref[0] * x)
    # HALF_Q = 10 is tiny and static -> unrolled Python loop; cos goes to the
    # EUP, the multiply-accumulate to the VPU; scalars come from SMEM.
    for q in range(1, HALF_Q):
        acc = acc + wh_ref[q] * jnp.cos(d_ref[q] * x)
    o_ref[...] = s * acc


def gauss_legendre_quadrature(x, a=0.0, b=1.0, *, tb=256, tn=1024):
    """Integrate sin(t * x) over t in [a, b] elementwise for x of shape (B, N)."""
    B, N = x.shape

    # --- host-side scalar precompute (folds half-scale + pair factor into weights) ---
    locs_np, wts_np = np.polynomial.legendre.leggauss(Q)
    half = 0.5 * (float(b) - float(a))
    mid = 0.5 * (float(a) + float(b))
    d = jnp.asarray((half * locs_np[:HALF_Q]).astype(np.float32))           # (10,)
    wh = jnp.asarray((2.0 * half * wts_np[:HALF_Q]).astype(np.float32))     # (10,)
    m = jnp.asarray([mid], dtype=jnp.float32)                               # (1,)

    # --- tile sizing: lane-dense (TN % 128 == 0), sublane-aligned (TB % 8 == 0) ---
    TB = min(int(tb), 8 * pl.cdiv(B, 8))
    TN = min(int(tn), 128 * pl.cdiv(N, 128))
    TB = 8 * pl.cdiv(TB, 8)
    TN = 128 * pl.cdiv(TN, 128)
    Bp = TB * pl.cdiv(B, TB)
    Np = TN * pl.cdiv(N, TN)

    xp = x.astype(jnp.float32)
    if (Bp, Np) != (B, N):
        # pad so the kernel never emits masked partial stores; padded lanes are
        # computed (cheap) and sliced off afterwards.
        xp = jnp.pad(xp, ((0, Bp - B), (0, Np - N)))

    grid = (Bp // TB, Np // TN)

    out = pl.pallas_call(
        _gauss_legendre_sin_kernel,
        out_shape=jax.ShapeDtypeStruct((Bp, Np), jnp.float32),
        grid=grid,
        in_specs=[
            pl.BlockSpec(memory_space=pltpu.MemorySpace.SMEM),       # m  (1,)
            pl.BlockSpec(memory_space=pltpu.MemorySpace.SMEM),       # d  (10,)
            pl.BlockSpec(memory_space=pltpu.MemorySpace.SMEM),       # wh (10,)
            pl.BlockSpec((TB, TN), lambda i, j: (i, j)),             # X tile
        ],
        out_specs=pl.BlockSpec((TB, TN), lambda i, j: (i, j)),
        compiler_params=pltpu.CompilerParams(
            dimension_semantics=("parallel", "parallel")),           # megacore on v7x
        cost_estimate=pl.CostEstimate(
            flops=4 * (HALF_Q + 1) * Bp * Np,
            transcendentals=(HALF_Q + 1) * Bp * Np,
            bytes_accessed=8 * Bp * Np),
    )(m, d, wh, xp)

    if (Bp, Np) != (B, N):
        out = out[:B, :N]
    return out


def _reference(x, a=0.0, b=1.0):
    """Pure-JAX mirror of the PyTorch forward (same broadcasting / reduction, full 20 points)."""
    locs_np, wts_np = np.polynomial.legendre.leggauss(Q)
    locs = jnp.asarray(locs_np, dtype=jnp.float32)[:, None]      # (Q, 1)  (pad after lower_bound.dim())
    wts = jnp.asarray(wts_np, dtype=jnp.float32)
    t = 0.5 * (locs + 1.0) * (b - a) + a                         # (Q, 1)
    fx = jnp.sin(t[:, :, None] * x[None, :, :])                  # func(t) -> (Q, B, N)
    w = wts.reshape((Q,) + (1,) * (fx.ndim - 1))                 # (Q, 1, 1)
    res = (fx * w).sum(axis=0)
    return res * 0.5 * (b - a)


if __name__ == "__main__":
    key0, key1 = jax.random.split(jax.random.PRNGKey(0))
    a, b = 0.0, 1.0

    # Case 1: aligned small shape (single tile).
    B, N = 8, 128
    x = jax.random.uniform(key0, (B, N), dtype=jnp.float32, minval=0.5, maxval=3.0)
    out = jax.block_until_ready(gauss_legendre_quadrature(x, a, b))
    ref = _reference(x, a, b)
    analytic = (jnp.cos(x * a) - jnp.cos(x * b)) / x   # closed form of ∫ sin(c t) dt
    assert out.shape == (B, N)
    np.testing.assert_allclose(np.asarray(out), np.asarray(ref), rtol=1e-5, atol=1e-5)
    np.testing.assert_allclose(np.asarray(out), np.asarray(analytic), rtol=1e-4, atol=1e-4)

    # Case 2: unaligned shape -> exercises padding, multi-tile grid, lane-dense stores.
    B2, N2 = 20, 200
    x2 = jax.random.uniform(key1, (B2, N2), dtype=jnp.float32, minval=0.5, maxval=3.0)
    out2 = jax.block_until_ready(gauss_legendre_quadrature(x2, a, b, tb=16, tn=128))
    ref2 = _reference(x2, a, b)
    assert out2.shape == (B2, N2)
    np.testing.assert_allclose(np.asarray(out2), np.asarray(ref2), rtol=1e-5, atol=1e-5)

    print("KERNEL_OK")
</pallas_src>

<mosaic_0001>
module attributes {stable_mosaic.version = 11 : i64} {
  func.func @_gauss_legendre_sin_kernel(%arg0: i32, %arg1: i32, %arg2: memref<1xf32, #tpu.memory_space<smem>>, %arg3: memref<10xf32, #tpu.memory_space<smem>>, %arg4: memref<10xf32, #tpu.memory_space<smem>>, %arg5: memref<8x128xf32, #tpu.memory_space<vmem>>, %arg6: memref<8x128xf32, #tpu.memory_space<vmem>>) attributes {dimension_semantics = [#tpu.dimension_semantics<parallel>, #tpu.dimension_semantics<parallel>], iteration_bounds = array<i64: 1, 1>, scalar_prefetch = 0 : i64, scratch_operands = 0 : i64, tpu.core_type = #tpu.core_type<tc>, window_params = [{transform_indices = @transform_0, window_bounds = array<i64: 1>}, {transform_indices = @transform_1, window_bounds = array<i64: 10>}, {transform_indices = @transform_2, window_bounds = array<i64: 10>}, {transform_indices = @transform_3, window_bounds = array<i64: 8, 128>}, {transform_indices = @transform_4, window_bounds = array<i64: 8, 128>}]} {
    %c0 = arith.constant 0 : index
    %c0_0 = arith.constant 0 : index
    %0 = vector.load %arg5[%c0, %c0_0] : memref<8x128xf32, #tpu.memory_space<vmem>>, vector<8x128xf32>
    %c0_1 = arith.constant 0 : index
    %1 = memref.load %arg2[%c0_1] : memref<1xf32, #tpu.memory_space<smem>>
    %2 = vector.broadcast %1 : f32 to vector<8x128xf32>
    %3 = arith.mulf %2, %0 : vector<8x128xf32>
    %4 = math.sin %3 : vector<8x128xf32>
    %c0_2 = arith.constant 0 : index
    %5 = memref.load %arg4[%c0_2] : memref<10xf32, #tpu.memory_space<smem>>
    %c0_3 = arith.constant 0 : index
    %6 = memref.load %arg3[%c0_3] : memref<10xf32, #tpu.memory_space<smem>>
    %7 = vector.broadcast %6 : f32 to vector<8x128xf32>
    %8 = arith.mulf %7, %0 : vector<8x128xf32>
    %9 = math.cos %8 : vector<8x128xf32>
    %10 = vector.broadcast %5 : f32 to vector<8x128xf32>
    %11 = arith.mulf %10, %9 : vector<8x128xf32>
    %c1 = arith.constant 1 : index
    %12 = memref.load %arg4[%c1] : memref<10xf32, #tpu.memory_space<smem>>
    %c1_4 = arith.constant 1 : index
    %13 = memref.load %arg3[%c1_4] : memref<10xf32, #tpu.memory_space<smem>>
    %14 = vector.broadcast %13 : f32 to vector<8x128xf32>
    %15 = arith.mulf %14, %0 : vector<8x128xf32>
    %16 = math.cos %15 : vector<8x128xf32>
    %17 = vector.broadcast %12 : f32 to vector<8x128xf32>
    %18 = arith.mulf %17, %16 : vector<8x128xf32>
    %19 = arith.addf %11, %18 : vector<8x128xf32>
    %c2 = arith.constant 2 : index
    %20 = memref.load %arg4[%c2] : memref<10xf32, #tpu.memory_space<smem>>
    %c2_5 = arith.constant 2 : index
    %21 = memref.load %arg3[%c2_5] : memref<10xf32, #tpu.memory_space<smem>>
    %22 = vector.broadcast %21 : f32 to vector<8x128xf32>
    %23 = arith.mulf %22, %0 : vector<8x128xf32>
    %24 = math.cos %23 : vector<8x128xf32>
    %25 = vector.broadcast %20 : f32 to vector<8x128xf32>
    %26 = arith.mulf %25, %24 : vector<8x128xf32>
    %27 = arith.addf %19, %26 : vector<8x128xf32>
    %c3 = arith.constant 3 : index
    %28 = memref.load %arg4[%c3] : memref<10xf32, #tpu.memory_space<smem>>
    %c3_6 = arith.constant 3 : index
    %29 = memref.load %arg3[%c3_6] : memref<10xf32, #tpu.memory_space<smem>>
    %30 = vector.broadcast %29 : f32 to vector<8x128xf32>
    %31 = arith.mulf %30, %0 : vector<8x128xf32>
    %32 = math.cos %31 : vector<8x128xf32>
    %33 = vector.broadcast %28 : f32 to vector<8x128xf32>
    %34 = arith.mulf %33, %32 : vector<8x128xf32>
    %35 = arith.addf %27, %34 : vector<8x128xf32>
    %c4 = arith.constant 4 : index
    %36 = memref.load %arg4[%c4] : memref<10xf32, #tpu.memory_space<smem>>
    %c4_7 = arith.constant 4 : index
    %37 = memref.load %arg3[%c4_7] : memref<10xf32, #tpu.memory_space<smem>>
    %38 = vector.broadcast %37 : f32 to vector<8x128xf32>
    %39 = arith.mulf %38, %0 : vector<8x128xf32>
    %40 = math.cos %39 : vector<8x128xf32>
    %41 = vector.broadcast %36 : f32 to vector<8x128xf32>
    %42 = arith.mulf %41, %40 : vector<8x128xf32>
    %43 = arith.addf %35, %42 : vector<8x128xf32>
    %c5 = arith.constant 5 : index
    %44 = memref.load %arg4[%c5] : memref<10xf32, #tpu.memory_space<smem>>
    %c5_8 = arith.constant 5 : index
    %45 = memref.load %arg3[%c5_8] : memref<10xf32, #tpu.memory_space<smem>>
    %46 = vector.broadcast %45 : f32 to vector<8x128xf32>
    %47 = arith.mulf %46, %0 : vector<8x128xf32>
    %48 = math.cos %47 : vector<8x128xf32>
    %49 = vector.broadcast %44 : f32 to vector<8x128xf32>
    %50 = arith.mulf %49, %48 : vector<8x128xf32>
    %51 = arith.addf %43, %50 : vector<8x128xf32>
    %c6 = arith.constant 6 : index
    %52 = memref.load %arg4[%c6] : memref<10xf32, #tpu.memory_space<smem>>
    %c6_9 = arith.constant 6 : index
    %53 = memref.load %arg3[%c6_9] : memref<10xf32, #tpu.memory_space<smem>>
    %54 = vector.broadcast %53 : f32 to vector<8x128xf32>
    %55 = arith.mulf %54, %0 : vector<8x128xf32>
    %56 = math.cos %55 : vector<8x128xf32>
    %57 = vector.broadcast %52 : f32 to vector<8x128xf32>
    %58 = arith.mulf %57, %56 : vector<8x128xf32>
    %59 = arith.addf %51, %58 : vector<8x128xf32>
    %c7 = arith.constant 7 : index
    %60 = memref.load %arg4[%c7] : memref<10xf32, #tpu.memory_space<smem>>
    %c7_10 = arith.constant 7 : index
    %61 = memref.load %arg3[%c7_10] : memref<10xf32, #tpu.memory_space<smem>>
    %62 = vector.broadcast %61 : f32 to vector<8x128xf32>
    %63 = arith.mulf %62, %0 : vector<8x128xf32>
    %64 = math.cos %63 : vector<8x128xf32>
    %65 = vector.broadcast %60 : f32 to vector<8x128xf32>
    %66 = arith.mulf %65, %64 : vector<8x128xf32>
    %67 = arith.addf %59, %66 : vector<8x128xf32>
    %c8 = arith.constant 8 : index
    %68 = memref.load %arg4[%c8] : memref<10xf32, #tpu.memory_space<smem>>
    %c8_11 = arith.constant 8 : index
    %69 = memref.load %arg3[%c8_11] : memref<10xf32, #tpu.memory_space<smem>>
    %70 = vector.broadcast %69 : f32 to vector<8x128xf32>
    %71 = arith.mulf %70, %0 : vector<8x128xf32>
    %72 = math.cos %71 : vector<8x128xf32>
    %73 = vector.broadcast %68 : f32 to vector<8x128xf32>
    %74 = arith.mulf %73, %72 : vector<8x128xf32>
    %75 = arith.addf %67, %74 : vector<8x128xf32>
    %c9 = arith.constant 9 : index
    %76 = memref.load %arg4[%c9] : memref<10xf32, #tpu.memory_space<smem>>
    %c9_12 = arith.constant 9 : index
    %77 = memref.load %arg3[%c9_12] : memref<10xf32, #tpu.memory_space<smem>>
    %78 = vector.broadcast %77 : f32 to vector<8x128xf32>
    %79 = arith.mulf %78, %0 : vector<8x128xf32>
    %80 = math.cos %79 : vector<8x128xf32>
    %81 = vector.broadcast %76 : f32 to vector<8x128xf32>
    %82 = arith.mulf %81, %80 : vector<8x128xf32>
    %83 = arith.addf %75, %82 : vector<8x128xf32>
    %84 = arith.mulf %4, %83 : vector<8x128xf32>
    %c0_13 = arith.constant 0 : index
    %c0_14 = arith.constant 0 : index
    %85 = vector.load %arg6[%c0_13, %c0_14] : memref<8x128xf32, #tpu.memory_space<vmem>>, vector<8x128xf32>
    tpu.vector_store %arg6[%c0_13, %c0_14], %84 {strides = array<i32>} : memref<8x128xf32, #tpu.memory_space<vmem>>, vector<8x128xf32>,
    return
  }
  func.func @transform_0(%arg0: i32, %arg1: i32) -> i32 {
    %c0_i32 = arith.constant 0 : i32
    %c0_i32_0 = arith.constant 0 : i32
    return %c0_i32 : i32
  }
  func.func @transform_1(%arg0: i32, %arg1: i32) -> i32 {
    %c0_i32 = arith.constant 0 : i32
    %c0_i32_0 = arith.constant 0 : i32
    return %c0_i32 : i32
  }
  func.func @transform_2(%arg0: i32, %arg1: i32) -> i32 {
    %c0_i32 = arith.constant 0 : i32
    %c0_i32_0 = arith.constant 0 : i32
    return %c0_i32 : i32
  }
  func.func @transform_3(%arg0: i32, %arg1: i32) -> (i32, i32) {
    %c0_i32 = arith.constant 0 : i32
    return %arg0, %arg1 : i32, i32
  }
  func.func @transform_4(%arg0: i32, %arg1: i32) -> (i32, i32) {
    %c0_i32 = arith.constant 0 : i32
    return %arg0, %arg1 : i32, i32
  }
}

</mosaic_0001>

<llo_original>
// kernel: tpu_custom_call.1
$region0: #{tpu_custom_call.1}
  #allocation0 [shape = 'u32[]', space=smem, size = 0x4, offset = 0x4, fixed_abs, tag = 'smem constant byte address 0x4 - core index']
  #allocation1 [shape = 'u32[144,128]{1,0:T(1,128)}', space=vmem, size = 0x12000, scoped, tag = 'internal scratch']
  #allocation2 [shape = 'f32[1]{0:T(128)S(6)}', space=smem, size = 0x200, scoped, tag = 'scoped memory for tpu_custom_call.1']
  %s0 = inlined_call_operand.<no memory space> [shape: f32[1], index: 0, kind: input, shape index: {}]
  %s1 = inlined_call_operand.vmem [shape: f32[10], index: 1, kind: input, shape index: {}]
  %s2 = inlined_call_operand.vmem [shape: f32[10], index: 2, kind: input, shape index: {}]
  %s3 = inlined_call_operand.hbm [shape: f32[8,128], index: 3, kind: input, shape index: {}]
  %s4 = inlined_call_operand.hbm [shape: f32[8,128], index: 4, kind: output, shape index: {}]
  %s5 = sld [smem:[#allocation0]]
  $region38: #{tpu_custom_call.1} parent=0
    _
  %s7 = ssub.s32 1, %s5
  %s8 = scalar_select 0, %s7, %s5
  %9 = sst [smem:[#allocation2]] %s0
  $region1: #{tpu_custom_call.1} parent=0
    #allocation3 [shape = 'u8[512]{0}', space=smem, size = 0x200, scoped, tag = 'input window, operand 1, single buffered']
    #allocation4 [shape = 's32[1]{0}', space=sflag, size = 0x4, scoped, tag = 'scoped memory for tpu_custom_call.1']
    #allocation5 [shape = 's32[1]{0}', space=sflag, size = 0x4, scoped, tag = 'scoped memory for tpu_custom_call.1']
    #allocation6 [shape = 's32[1]{0}', space=sflag, size = 0x4, scoped, tag = 'scoped memory for tpu_custom_call.1']
    #allocation7 [shape = 'u8[512]{0}', space=smem, size = 0x200, scoped, tag = 'input window, operand 2, single buffered']
    #allocation8 [shape = 's32[1]{0}', space=sflag, size = 0x4, scoped, tag = 'scoped memory for tpu_custom_call.1']
    #allocation9 [shape = 'u8[4096]{0}', space=vmem, size = 0x1000, scoped, tag = 'input window, operand 3, single buffered']
    #allocation10 [shape = 'u8[4096]{0}', space=vmem, size = 0x1000, scoped, tag = 'output window, operand 0, single buffered']
    %10 = vsyncpa [#allocation6], 0
    %11 = vsyncpa [#allocation8], 0
    %12 = vsyncpa [#allocation4], 0
    %13 = vsyncpa [#allocation5], 0
    // Predicated region
    $region2: #{tpu_custom_call.1} parent=1 // pred_check
      _
    $region3: #{tpu_custom_call.1} parent=1 // pred_check_branch
      %15 = sbr.rel (0) target = $region5
    $region4: #{tpu_custom_call.1} parent=1 // pred_region
      _
    $region5: #{tpu_custom_call.1} parent=1 // pred_fallthru
      _
    // Predicated region
    $region6: #{tpu_custom_call.1} parent=1 // pred_check
      _
    $region7: #{tpu_custom_call.1} parent=1 // pred_check_branch
      %17 = sbr.rel (0) target = $region9
    $region8: #{tpu_custom_call.1} parent=1 // pred_region
      %s19 = ssub.s32 16, 16
      %20 = vsyncadd [#allocation6], %s19
      %s22 = sshll.u32 %s1, 4
      %s23 = int_to_ptr.vmem [resolvable:$true] %s22
      %25 = dma.vmem_to_smem %s23, 16, [#allocation3], [#allocation6]
    $region9: #{tpu_custom_call.1} parent=1 // pred_fallthru
      _
    // Predicated region
    $region10: #{tpu_custom_call.1} parent=1 // pred_check
      _
    $region11: #{tpu_custom_call.1} parent=1 // pred_check_branch
      %27 = sbr.rel (0) target = $region13
    $region12: #{tpu_custom_call.1} parent=1 // pred_region
      %s29 = ssub.s32 16, 16
      %30 = vsyncadd [#allocation8], %s29
      %s32 = sshll.u32 %s2, 4
      %s33 = int_to_ptr.vmem [resolvable:$true] %s32
      %35 = dma.vmem_to_smem %s33, 16, [#allocation7], [#allocation8]
    $region13: #{tpu_custom_call.1} parent=1 // pred_fallthru
      _
    // Predicated region
    $region14: #{tpu_custom_call.1} parent=1 // pred_check
      _
    $region15: #{tpu_custom_call.1} parent=1 // pred_check_branch
      %37 = sbr.rel (0) target = $region17
    $region16: #{tpu_custom_call.1} parent=1 // pred_region
      %s39 = ssub.s32 128, 128
      %40 = vsyncadd [#allocation4], %s39
      %s42 = sshll.u32 [#allocation9], 4
      %s43 = int_to_ptr.vmem [resolvable:$true] %s42
      %45 = dma.hbm_to_vmem [thread:$0]  %s3, 128, %s43, [#allocation4]
    $region17: #{tpu_custom_call.1} parent=1 // pred_fallthru
      _
    // Predicated region
    $region18: #{tpu_custom_call.1} parent=1 // pred_check
      _
    $region19: #{tpu_custom_call.1} parent=1 // pred_check_branch
      %47 = sbr.rel (0) target = $region21
    $region20: #{tpu_custom_call.1} parent=1 // pred_region
      %48 = dma.done [#allocation6], 16
    $region21: #{tpu_custom_call.1} parent=1 // pred_fallthru
      _
    // Predicated region
    $region22: #{tpu_custom_call.1} parent=1 // pred_check
      _
    $region23: #{tpu_custom_call.1} parent=1 // pred_check_branch
      %50 = sbr.rel (0) target = $region25
    $region24: #{tpu_custom_call.1} parent=1 // pred_region
      %51 = dma.done [#allocation8], 16
    $region25: #{tpu_custom_call.1} parent=1 // pred_fallthru
      _
    // Predicated region
    $region26: #{tpu_custom_call.1} parent=1 // pred_check
      _
    $region27: #{tpu_custom_call.1} parent=1 // pred_check_branch
      %53 = sbr.rel (0) target = $region29
    $region28: #{tpu_custom_call.1} parent=1 // pred_region
      %54 = dma.done [#allocation4], 128
    $region29: #{tpu_custom_call.1} parent=1 // pred_fallthru
      _
    %55 = sfence
    %v56 = vld [vmem:[#allocation9] sm:$0xff]
    %s57 = sld [smem:[#allocation2]]
    %v58 = vstv %s57
    %v59 = vmul.f32 %v58, %v56
    %v60 = vand.u32 2147483647, %v59
    %vm61 = vcmp.le.f32.partialorder %v60, 0.7853982
    %vm62 = vcmp.lt.s32.totalorder %v59, 0
    %v63 = vand.u32 %v59, 2139095040
    %v64 = vshrl.u32 %v63, 23
    %v65 = vsub.s32 %v64, 127
    %v66 = vand.u32 2147483647, %v59
    %v67 = vand.u32 %v66, 8388607
    %v68 = vor.u32 %v67, 8388608
    %v69 = vsub.s32 0, %v68
    %v70 = vadd.s32 %v65, 1
    %vm71 = vcmp.gt.s32.totalorder %v70, 0
    %v72 = vsel %vm71, %v70, 0
    %v73 = vshrl.u32 %v72, 5
    %v74 = vand.u32 %v72, 31
    %v75 = vsub.s32 32, %v74
    %v76 = vshrl.u32 683565275, %v75
    %v77 = vshll.u32 683565275, %v74
    %v78 = vshrl.u32 2475754826, %v75
    %v79 = vor.u32 %v77, %v78
    %v80 = vshll.u32 2475754826, %v74
    %v81 = vshrl.u32 2131351028, %v75
    %v82 = vor.u32 %v80, %v81
    %v83 = vshll.u32 2131351028, %v74
    %v84 = vshrl.u32 2102212464, %v75
    %v85 = vor.u32 %v83, %v84
    %v86 = vshll.u32 2102212464, %v74
    %v87 = vshrl.u32 920167782, %v75
    %v88 = vor.u32 %v86, %v87
    %v89 = vshll.u32 920167782, %v74
    %v90 = vshrl.u32 1326507024, %v75
    %v91 = vor.u32 %v89, %v90
    %vm92 = vcmp.lt.s32.totalorder %v73, 1
    %vm93 = vcmp.lt.s32.totalorder %v73, 2
    %vm94 = vcmp.lt.s32.totalorder %v73, 3
    %vm95 = vcmp.lt.s32.totalorder %v73, 4
    %v96 = vsel %vm92, %v76, %v79
    %v97 = vsel %vm95, %v85, 2102212464
    %v98 = vsel %vm94, %v82, %v97
    %v99 = vsel %vm93, %v96, %v98
    %v100 = vsel %vm92, %v79, %v82
    %v101 = vsel %vm95, %v88, 920167782
    %v102 = vsel %vm94, %v85, %v101
    %v103 = vsel %vm93, %v100, %v102
    %v104 = vsel %vm92, %v82, %v85
    %v105 = vsel %vm95, %v91, 1326507024
    %v106 = vsel %vm94, %v88, %v105
    %v107 = vsel %vm93, %v104, %v106
    %v108 = vshll.u32 %v68, 8
    %v109 = vmul.u32.u64.compose %v108, %v107
    %v110 = vextract.low.u32 %v109
    %v111 = vextract.high.u32 %v109
    %v112 = vmul.u32.u64.compose %v108, %v103
    %v113 = vextract.low.u32 %v112
    %v114 = vextract.high.u32 %v112
    %v115 = vmul.u32 %v108, %v99
    %v116 = vadd.s32 %v111, %v113
    %vm117 = vc.u32 %v111, %v113
    %v118 = vadd.s32 %v114, 1
    %v119 = vsel %vm117, %v118, %v114
    %v120 = vadd.s32 %v115, %v119
    %v121 = vadd.s32 %v120, 536870912
    %v122 = vshrl.u32 %v121, 30
    %v123 = vshll.u32 %v122, 30
    %v124 = vsub.s32 %v120, %v123
    %vm125 = vcmp.lt.s32.totalorder %v124, 0
    %v126 = vsub.s32 0, %v124
    %v127 = vsel %vm125, %v126, %v124
    %v128 = vclz %v127
    %v129 = vsub.s32 %v128, 2
    %vm130 = vcmp.gt.s32.totalorder 0, %v129
    %v131 = vsel %vm130, 0, %v129
    %v132 = vsub.s32 32, %v131
    %v133 = vshll.u32 %v124, %v131
    %v134 = vshrl.u32 %v116, %v132
    %v135 = vor.u32 %v133, %v134
    %v136 = vsub.s32 4294967266, %v131
    %v137 = vadd.s32 %v136, 127
    %v138 = vshll.u32 %v137, 23
    %v139 = vor.u32 4788187, %v138
    %v140 = vand.u32 2147483647, %v139
    %v142 = vcvt.s32.f32 %v135
    %v143 = vmul.f32 %v142, %v140
    %v144 = vxor.u32 %v143, 2147483648
    %v145 = vsel %vm62, %v144, %v143
    %v146 = vsub.s32 4, %v122
    %v147 = vsel %vm62, %v146, %v122
    %v148 = vsel %vm61, %v59, %v145
    %v149 = vsel %vm61, 0, %v147
    %v150 = vcosq.f32.pop %v148
    %v151 = vsinq.f32.pop %v148
    %vm152 = vweird.f32 %v59
    %v153 = vadd.s32 %v149, 3
    %v154 = vand.u32 %v153, 3
    %vm155 = vcmp.lt.s32.totalorder %v154, 2
    %vm156 = vcmp.eq.s32.totalorder %v154, 0
    %v157 = vxor.u32 %v151, 2147483648
    %v158 = vsel %vm156, %v150, %v157
    %vm159 = vcmp.eq.s32.totalorder %v154, 2
    %v160 = vxor.u32 %v150, 2147483648
    %v161 = vsel %vm159, %v160, %v151
    %v162 = vsel %vm155, %v158, %v161
    %v163 = vsel %vm152, nan, %v162
    %s164 = sld [smem:[#allocation7]]
    %s165 = sld [smem:[#allocation3]]
    %v166 = vstv %s165
    %v167 = vmul.f32 %v166, %v56
    %v168 = vand.u32 2147483647, %v167
    %vm169 = vcmp.le.f32.partialorder %v168, 0.7853982
    %vm170 = vcmp.lt.s32.totalorder %v167, 0
    %v171 = vand.u32 %v167, 2139095040
    %v172 = vshrl.u32 %v171, 23
    %v173 = vsub.s32 %v172, 127
    %v174 = vand.u32 2147483647, %v167
    %v175 = vand.u32 %v174, 8388607
    %v176 = vor.u32 %v175, 8388608
    %v177 = vsub.s32 0, %v176
    %v178 = vadd.s32 %v173, 1
    %vm179 = vcmp.gt.s32.totalorder %v178, 0
    %v180 = vsel %vm179, %v178, 0
    %v181 = vshrl.u32 %v180, 5
    %v182 = vand.u32 %v180, 31
    %v183 = vsub.s32 32, %v182
    %v184 = vshrl.u32 683565275, %v183
    %v185 = vshll.u32 683565275, %v182
    %v186 = vshrl.u32 2475754826, %v183
    %v187 = vor.u32 %v185, %v186
    %v188 = vshll.u32 2475754826, %v182
    %v189 = vshrl.u32 2131351028, %v183
    %v190 = vor.u32 %v188, %v189
    %v191 = vshll.u32 2131351028, %v182
    %v192 = vshrl.u32 2102212464, %v183
    %v193 = vor.u32 %v191, %v192
    %v194 = vshll.u32 2102212464, %v182
    %v195 = vshrl.u32 920167782, %v183
    %v196 = vor.u32 %v194, %v195
    %v197 = vshll.u32 920167782, %v182
    %v198 = vshrl.u32 1326507024, %v183
    %v199 = vor.u32 %v197, %v198
    %vm200 = vcmp.lt.s32.totalorder %v181, 1
    %vm201 = vcmp.lt.s32.totalorder %v181, 2
    %vm202 = vcmp.lt.s32.totalorder %v181, 3
    %vm203 = vcmp.lt.s32.totalorder %v181, 4
    %v204 = vsel %vm200, %v184, %v187
    %v205 = vsel %vm203, %v193, 2102212464
    %v206 = vsel %vm202, %v190, %v205
    %v207 = vsel %vm201, %v204, %v206
    %v208 = vsel %vm200, %v187, %v190
    %v209 = vsel %vm203, %v196, 920167782
    %v210 = vsel %vm202, %v193, %v209
    %v211 = vsel %vm201, %v208, %v210
    %v212 = vsel %vm200, %v190, %v193
    %v213 = vsel %vm203, %v199, 1326507024
    %v214 = vsel %vm202, %v196, %v213
    %v215 = vsel %vm201, %v212, %v214
    %v216 = vshll.u32 %v176, 8
    %v217 = vmul.u32.u64.compose %v216, %v215
    %v218 = vextract.low.u32 %v217
    %v219 = vextract.high.u32 %v217
    %v220 = vmul.u32.u64.compose %v216, %v211
    %v221 = vextract.low.u32 %v220
    %v222 = vextract.high.u32 %v220
    %v223 = vmul.u32 %v216, %v207
    %v224 = vadd.s32 %v219, %v221
    %vm225 = vc.u32 %v219, %v221
    %v226 = vadd.s32 %v222, 1
    %v227 = vsel %vm225, %v226, %v222
    %v228 = vadd.s32 %v223, %v227
    %v229 = vadd.s32 %v228, 536870912
    %v230 = vshrl.u32 %v229, 30
    %v231 = vshll.u32 %v230, 30
    %v232 = vsub.s32 %v228, %v231
    %vm233 = vcmp.lt.s32.totalorder %v232, 0
    %v234 = vsub.s32 0, %v232
    %v235 = vsel %vm233, %v234, %v232
    %v236 = vclz %v235
    %v237 = vsub.s32 %v236, 2
    %vm238 = vcmp.gt.s32.totalorder 0, %v237
    %v239 = vsel %vm238, 0, %v237
    %v240 = vsub.s32 32, %v239
    %v241 = vshll.u32 %v232, %v239
    %v242 = vshrl.u32 %v224, %v240
    %v243 = vor.u32 %v241, %v242
    %v244 = vsub.s32 4294967266, %v239
    %v245 = vadd.s32 %v244, 127
    %v246 = vshll.u32 %v245, 23
    %v247 = vor.u32 4788187, %v246
    %v248 = vand.u32 2147483647, %v247
    %v250 = vcvt.s32.f32 %v243
    %v251 = vmul.f32 %v250, %v248
    %v252 = vxor.u32 %v251, 2147483648
    %v253 = vsel %vm170, %v252, %v251
    %v254 = vsub.s32 4, %v230
    %v255 = vsel %vm170, %v254, %v230
    %v256 = vsel %vm169, %v167, %v253
    %v257 = vsel %vm169, 0, %v255
    %v258 = vcosq.f32.pop %v256
    %v259 = vsinq.f32.pop %v256
    %vm260 = vweird.f32 %v167
    %v261 = vand.u32 %v257, 3
    %vm262 = vcmp.lt.s32.totalorder %v261, 2
    %vm263 = vcmp.eq.s32.totalorder %v261, 0
    %v264 = vxor.u32 %v259, 2147483648
    %v265 = vsel %vm263, %v258, %v264
    %vm266 = vcmp.eq.s32.totalorder %v261, 2
    %v267 = vxor.u32 %v258, 2147483648
    %v268 = vsel %vm266, %v267, %v259
    %v269 = vsel %vm262, %v265, %v268
    %v270 = vsel %vm260, nan, %v269
    %v271 = vstv %s164
    %v272 = vmul.f32 %v271, %v270
    %s273 = sld [smem:[#allocation7 + $0x1]]
    %s274 = sld [smem:[#allocation3 + $0x1]]
    %v275 = vstv %s274
    %v276 = vmul.f32 %v275, %v56
    %v277 = vand.u32 2147483647, %v276
    %vm278 = vcmp.le.f32.partialorder %v277, 0.7853982
    %vm279 = vcmp.lt.s32.totalorder %v276, 0
    %v280 = vand.u32 %v276, 2139095040
    %v281 = vshrl.u32 %v280, 23
    %v282 = vsub.s32 %v281, 127
    %v283 = vand.u32 2147483647, %v276
    %v284 = vand.u32 %v283, 8388607
    %v285 = vor.u32 %v284, 8388608
    %v286 = vsub.s32 0, %v285
    %v287 = vadd.s32 %v282, 1
    %vm288 = vcmp.gt.s32.totalorder %v287, 0
    %v289 = vsel %vm288, %v287, 0
    %v290 = vshrl.u32 %v289, 5
    %v291 = vand.u32 %v289, 31
    %v292 = vsub.s32 32, %v291
    %v293 = vshrl.u32 683565275, %v292
    %v294 = vshll.u32 683565275, %v291
    %v295 = vshrl.u32 2475754826, %v292
    %v296 = vor.u32 %v294, %v295
    %v297 = vshll.u32 2475754826, %v291
    %v298 = vshrl.u32 2131351028, %v292
    %v299 = vor.u32 %v297, %v298
    %v300 = vshll.u32 2131351028, %v291
    %v301 = vshrl.u32 2102212464, %v292
    %v302 = vor.u32 %v300, %v301
    %v303 = vshll.u32 2102212464, %v291
    %v304 = vshrl.u32 920167782, %v292
    %v305 = vor.u32 %v303, %v304
    %v306 = vshll.u32 920167782, %v291
    %v307 = vshrl.u32 1326507024, %v292
    %v308 = vor.u32 %v306, %v307
    %vm309 = vcmp.lt.s32.totalorder %v290, 1
    %vm310 = vcmp.lt.s32.totalorder %v290, 2
    %vm311 = vcmp.lt.s32.totalorder %v290, 3
    %vm312 = vcmp.lt.s32.totalorder %v290, 4
    %v313 = vsel %vm309, %v293, %v296
    %v314 = vsel %vm312, %v302, 2102212464
    %v315 = vsel %vm311, %v299, %v314
    %v316 = vsel %vm310, %v313, %v315
    %v317 = vsel %vm309, %v296, %v299
    %v318 = vsel %vm312, %v305, 920167782
    %v319 = vsel %vm311, %v302, %v318
    %v320 = vsel %vm310, %v317, %v319
    %v321 = vsel %vm309, %v299, %v302
    %v322 = vsel %vm312, %v308, 1326507024
    %v323 = vsel %vm311, %v305, %v322
    %v324 = vsel %vm310, %v321, %v323
    %v325 = vshll.u32 %v285, 8
    %v326 = vmul.u32.u64.compose %v325, %v324
    %v327 = vextract.low.u32 %v326
    %v328 = vextract.high.u32 %v326
    %v329 = vmul.u32.u64.compose %v325, %v320
    %v330 = vextract.low.u32 %v329
    %v331 = vextract.high.u32 %v329
    %v332 = vmul.u32 %v325, %v316
    %v333 = vadd.s32 %v328, %v330
    %vm334 = vc.u32 %v328, %v330
    %v335 = vadd.s32 %v331, 1
    %v336 = vsel %vm334, %v335, %v331
    %v337 = vadd.s32 %v332, %v336
    %v338 = vadd.s32 %v337, 536870912
    %v339 = vshrl.u32 %v338, 30
    %v340 = vshll.u32 %v339, 30
    %v341 = vsub.s32 %v337, %v340
    %vm342 = vcmp.lt.s32.totalorder %v341, 0
    %v343 = vsub.s32 0, %v341
    %v344 = vsel %vm342, %v343, %v341
    %v345 = vclz %v344
    %v346 = vsub.s32 %v345, 2
    %vm347 = vcmp.gt.s32.totalorder 0, %v346
    %v348 = vsel %vm347, 0, %v346
    %v349 = vsub.s32 32, %v348
    %v350 = vshll.u32 %v341, %v348
    %v351 = vshrl.u32 %v333, %v349
    %v352 = vor.u32 %v350, %v351
    %v353 = vsub.s32 4294967266, %v348
    %v354 = vadd.s32 %v353, 127
    %v355 = vshll.u32 %v354, 23
    %v356 = vor.u32 4788187, %v355
    %v357 = vand.u32 2147483647, %v356
    %v359 = vcvt.s32.f32 %v352
    %v360 = vmul.f32 %v359, %v357
    %v361 = vxor.u32 %v360, 2147483648
    %v362 = vsel %vm279, %v361, %v360
    %v363 = vsub.s32 4, %v339
    %v364 = vsel %vm279, %v363, %v339
    %v365 = vsel %vm278, %v276, %v362
    %v366 = vsel %vm278, 0, %v364
    %v367 = vcosq.f32.pop %v365
    %v368 = vsinq.f32.pop %v365
    %vm369 = vweird.f32 %v276
    %v370 = vand.u32 %v366, 3
    %vm371 = vcmp.lt.s32.totalorder %v370, 2
    %vm372 = vcmp.eq.s32.totalorder %v370, 0
    %v373 = vxor.u32 %v368, 2147483648
    %v374 = vsel %vm372, %v367, %v373
    %vm375 = vcmp.eq.s32.totalorder %v370, 2
    %v376 = vxor.u32 %v367, 2147483648
    %v377 = vsel %vm375, %v376, %v368
    %v378 = vsel %vm371, %v374, %v377
    %v379 = vsel %vm369, nan, %v378
    %v380 = vstv %s273
    %v381 = vmul.f32 %v380, %v379
    %v382 = vadd.f32 %v272, %v381
    %s383 = sld [smem:[#allocation7 + $0x2]]
    %s384 = sld [smem:[#allocation3 + $0x2]]
    %v385 = vstv %s384
    %v386 = vmul.f32 %v385, %v56
    %v387 = vand.u32 2147483647, %v386
    %vm388 = vcmp.le.f32.partialorder %v387, 0.7853982
    %vm389 = vcmp.lt.s32.totalorder %v386, 0
    %v390 = vand.u32 %v386, 2139095040
    %v391 = vshrl.u32 %v390, 23
    %v392 = vsub.s32 %v391, 127
    %v393 = vand.u32 2147483647, %v386
    %v394 = vand.u32 %v393, 8388607
    %v395 = vor.u32 %v394, 8388608
    %v396 = vsub.s32 0, %v395
    %v397 = vadd.s32 %v392, 1
    %vm398 = vcmp.gt.s32.totalorder %v397, 0
    %v399 = vsel %vm398, %v397, 0
    %v400 = vshrl.u32 %v399, 5
    %v401 = vand.u32 %v399, 31
    %v402 = vsub.s32 32, %v401
    %v403 = vshrl.u32 683565275, %v402
    %v404 = vshll.u32 683565275, %v401
    %v405 = vshrl.u32 2475754826, %v402
    %v406 = vor.u32 %v404, %v405
    %v407 = vshll.u32 2475754826, %v401
    %v408 = vshrl.u32 2131351028, %v402
    %v409 = vor.u32 %v407, %v408
    %v410 = vshll.u32 2131351028, %v401
    %v411 = vshrl.u32 2102212464, %v402
    %v412 = vor.u32 %v410, %v411
    %v413 = vshll.u32 2102212464, %v401
    %v414 = vshrl.u32 920167782, %v402
    %v415 = vor.u32 %v413, %v414
    %v416 = vshll.u32 920167782, %v401
    %v417 = vshrl.u32 1326507024, %v402
    %v418 = vor.u32 %v416, %v417
    %vm419 = vcmp.lt.s32.totalorder %v400, 1
    %vm420 = vcmp.lt.s32.totalorder %v400, 2
    %vm421 = vcmp.lt.s32.totalorder %v400, 3
    %vm422 = vcmp.lt.s32.totalorder %v400, 4
    %v423 = vsel %vm419, %v403, %v406
    %v424 = vsel %vm422, %v412, 2102212464
    %v425 = vsel %vm421, %v409, %v424
    %v426 = vsel %vm420, %v423, %v425
    %v427 = vsel %vm419, %v406, %v409
    %v428 = vsel %vm422, %v415, 920167782
    %v429 = vsel %vm421, %v412, %v428
    %v430 = vsel %vm420, %v427, %v429
    %v431 = vsel %vm419, %v409, %v412
    %v432 = vsel %vm422, %v418, 1326507024
    %v433 = vsel %vm421, %v415, %v432
    %v434 = vsel %vm420, %v431, %v433
    %v435 = vshll.u32 %v395, 8
    %v436 = vmul.u32.u64.compose %v435, %v434
    %v437 = vextract.low.u32 %v436
    %v438 = vextract.high.u32 %v436
    %v439 = vmul.u32.u64.compose %v435, %v430
    %v440 = vextract.low.u32 %v439
    %v441 = vextract.high.u32 %v439
    %v442 = vmul.u32 %v435, %v426
    %v443 = vadd.s32 %v438, %v440
    %vm444 = vc.u32 %v438, %v440
    %v445 = vadd.s32 %v441, 1
    %v446 = vsel %vm444, %v445, %v441
    %v447 = vadd.s32 %v442, %v446
    %v448 = vadd.s32 %v447, 536870912
    %v449 = vshrl.u32 %v448, 30
    %v450 = vshll.u32 %v449, 30
    %v451 = vsub.s32 %v447, %v450
    %vm452 = vcmp.lt.s32.totalorder %v451, 0
    %v453 = vsub.s32 0, %v451
    %v454 = vsel %vm452, %v453, %v451
    %v455 = vclz %v454
    %v456 = vsub.s32 %v455, 2
    %vm457 = vcmp.gt.s32.totalorder 0, %v456
    %v458 = vsel %vm457, 0, %v456
    %v459 = vsub.s32 32, %v458
    %v460 = vshll.u32 %v451, %v458
    %v461 = vshrl.u32 %v443, %v459
    %v462 = vor.u32 %v460, %v461
    %v463 = vsub.s32 4294967266, %v458
    %v464 = vadd.s32 %v463, 127
    %v465 = vshll.u32 %v464, 23
    %v466 = vor.u32 4788187, %v465
    %v467 = vand.u32 2147483647, %v466
    %v469 = vcvt.s32.f32 %v462
    %v470 = vmul.f32 %v469, %v467
    %v471 = vxor.u32 %v470, 2147483648
    %v472 = vsel %vm389, %v471, %v470
    %v473 = vsub.s32 4, %v449
    %v474 = vsel %vm389, %v473, %v449
    %v475 = vsel %vm388, %v386, %v472
    %v476 = vsel %vm388, 0, %v474
    %v477 = vcosq.f32.pop %v475
    %v478 = vsinq.f32.pop %v475
    %vm479 = vweird.f32 %v386
    %v480 = vand.u32 %v476, 3
    %vm481 = vcmp.lt.s32.totalorder %v480, 2
    %vm482 = vcmp.eq.s32.totalorder %v480, 0
    %v483 = vxor.u32 %v478, 2147483648
    %v484 = vsel %vm482, %v477, %v483
    %vm485 = vcmp.eq.s32.totalorder %v480, 2
    %v486 = vxor.u32 %v477, 2147483648
    %v487 = vsel %vm485, %v486, %v478
    %v488 = vsel %vm481, %v484, %v487
    %v489 = vsel %vm479, nan, %v488
    %v490 = vstv %s383
    %v491 = vmul.f32 %v490, %v489
    %v492 = vadd.f32 %v382, %v491
    %s493 = sld [smem:[#allocation7 + $0x3]]
    %s494 = sld [smem:[#allocation3 + $0x3]]
    %v495 = vstv %s494
    %v496 = vmul.f32 %v495, %v56
    %v497 = vand.u32 2147483647, %v496
    %vm498 = vcmp.le.f32.partialorder %v497, 0.7853982
    %vm499 = vcmp.lt.s32.totalorder %v496, 0
    %v500 = vand.u32 %v496, 2139095040
    %v501 = vshrl.u32 %v500, 23
    %v502 = vsub.s32 %v501, 127
    %v503 = vand.u32 2147483647, %v496
    %v504 = vand.u32 %v503, 8388607
    %v505 = vor.u32 %v504, 8388608
    %v506 = vsub.s32 0, %v505
    %v507 = vadd.s32 %v502, 1
    %vm508 = vcmp.gt.s32.totalorder %v507, 0
    %v509 = vsel %vm508, %v507, 0
    %v510 = vshrl.u32 %v509, 5
    %v511 = vand.u32 %v509, 31
    %v512 = vsub.s32 32, %v511
    %v513 = vshrl.u32 683565275, %v512
    %v514 = vshll.u32 683565275, %v511
    %v515 = vshrl.u32 2475754826, %v512
    %v516 = vor.u32 %v514, %v515
    %v517 = vshll.u32 2475754826, %v511
    %v518 = vshrl.u32 2131351028, %v512
    %v519 = vor.u32 %v517, %v518
    %v520 = vshll.u32 2131351028, %v511
    %v521 = vshrl.u32 2102212464, %v512
    %v522 = vor.u32 %v520, %v521
    %v523 = vshll.u32 2102212464, %v511
    %v524 = vshrl.u32 920167782, %v512
    %v525 = vor.u32 %v523, %v524
    %v526 = vshll.u32 920167782, %v511
    %v527 = vshrl.u32 1326507024, %v512
    %v528 = vor.u32 %v526, %v527
    %vm529 = vcmp.lt.s32.totalorder %v510, 1
    %vm530 = vcmp.lt.s32.totalorder %v510, 2
    %vm531 = vcmp.lt.s32.totalorder %v510, 3
    %vm532 = vcmp.lt.s32.totalorder %v510, 4
    %v533 = vsel %vm529, %v513, %v516
    %v534 = vsel %vm532, %v522, 2102212464
    %v535 = vsel %vm531, %v519, %v534
    %v536 = vsel %vm530, %v533, %v535
    %v537 = vsel %vm529, %v516, %v519
    %v538 = vsel %vm532, %v525, 920167782
    %v539 = vsel %vm531, %v522, %v538
    %v540 = vsel %vm530, %v537, %v539
    %v541 = vsel %vm529, %v519, %v522
    %v542 = vsel %vm532, %v528, 1326507024
    %v543 = vsel %vm531, %v525, %v542
    %v544 = vsel %vm530, %v541, %v543
    %v545 = vshll.u32 %v505, 8
    %v546 = vmul.u32.u64.compose %v545, %v544
    %v547 = vextract.low.u32 %v546
    %v548 = vextract.high.u32 %v546
    %v549 = vmul.u32.u64.compose %v545, %v540
    %v550 = vextract.low.u32 %v549
    %v551 = vextract.high.u32 %v549
    %v552 = vmul.u32 %v545, %v536
    %v553 = vadd.s32 %v548, %v550
    %vm554 = vc.u32 %v548, %v550
    %v555 = vadd.s32 %v551, 1
    %v556 = vsel %vm554, %v555, %v551
    %v557 = vadd.s32 %v552, %v556
    %v558 = vadd.s32 %v557, 536870912
    %v559 = vshrl.u32 %v558, 30
    %v560 = vshll.u32 %v559, 30
    %v561 = vsub.s32 %v557, %v560
    %vm562 = vcmp.lt.s32.totalorder %v561, 0
    %v563 = vsub.s32 0, %v561
    %v564 = vsel %vm562, %v563, %v561
    %v565 = vclz %v564
    %v566 = vsub.s32 %v565, 2
    %vm567 = vcmp.gt.s32.totalorder 0, %v566
    %v568 = vsel %vm567, 0, %v566
    %v569 = vsub.s32 32, %v568
    %v570 = vshll.u32 %v561, %v568
    %v571 = vshrl.u32 %v553, %v569
    %v572 = vor.u32 %v570, %v571
    %v573 = vsub.s32 4294967266, %v568
    %v574 = vadd.s32 %v573, 127
    %v575 = vshll.u32 %v574, 23
    %v576 = vor.u32 4788187, %v575
    %v577 = vand.u32 2147483647, %v576
    %v579 = vcvt.s32.f32 %v572
    %v580 = vmul.f32 %v579, %v577
    %v581 = vxor.u32 %v580, 2147483648
    %v582 = vsel %vm499, %v581, %v580
    %v583 = vsub.s32 4, %v559
    %v584 = vsel %vm499, %v583, %v559
    %v585 = vsel %vm498, %v496, %v582
    %v586 = vsel %vm498, 0, %v584
    %v587 = vcosq.f32.pop %v585
    %v588 = vsinq.f32.pop %v585
    %vm589 = vweird.f32 %v496
    %v590 = vand.u32 %v586, 3
    %vm591 = vcmp.lt.s32.totalorder %v590, 2
    %vm592 = vcmp.eq.s32.totalorder %v590, 0
    %v593 = vxor.u32 %v588, 2147483648
    %v594 = vsel %vm592, %v587, %v593
    %vm595 = vcmp.eq.s32.totalorder %v590, 2
    %v596 = vxor.u32 %v587, 2147483648
    %v597 = vsel %vm595, %v596, %v588
    %v598 = vsel %vm591, %v594, %v597
    %v599 = vsel %vm589, nan, %v598
    %v600 = vstv %s493
    %v601 = vmul.f32 %v600, %v599
    %v602 = vadd.f32 %v492, %v601
    %s603 = sld [smem:[#allocation7 + $0x4]]
    %s604 = sld [smem:[#allocation3 + $0x4]]
    %v605 = vstv %s604
    %v606 = vmul.f32 %v605, %v56
    %v607 = vand.u32 2147483647, %v606
    %vm608 = vcmp.le.f32.partialorder %v607, 0.7853982
    %vm609 = vcmp.lt.s32.totalorder %v606, 0
    %v610 = vand.u32 %v606, 2139095040
    %v611 = vshrl.u32 %v610, 23
    %v612 = vsub.s32 %v611, 127
    %v613 = vand.u32 2147483647, %v606
    %v614 = vand.u32 %v613, 8388607
    %v615 = vor.u32 %v614, 8388608
    %v616 = vsub.s32 0, %v615
    %v617 = vadd.s32 %v612, 1
    %vm618 = vcmp.gt.s32.totalorder %v617, 0
    %v619 = vsel %vm618, %v617, 0
    %v620 = vshrl.u32 %v619, 5
    %v621 = vand.u32 %v619, 31
    %v622 = vsub.s32 32, %v621
    %v623 = vshrl.u32 683565275, %v622
    %v624 = vshll.u32 683565275, %v621
    %v625 = vshrl.u32 2475754826, %v622
    %v626 = vor.u32 %v624, %v625
    %v627 = vshll.u32 2475754826, %v621
    %v628 = vshrl.u32 2131351028, %v622
    %v629 = vor.u32 %v627, %v628
    %v630 = vshll.u32 2131351028, %v621
    %v631 = vshrl.u32 2102212464, %v622
    %v632 = vor.u32 %v630, %v631
    %v633 = vshll.u32 2102212464, %v621
    %v634 = vshrl.u32 920167782, %v622
    %v635 = vor.u32 %v633, %v634
    %v636 = vshll.u32 920167782, %v621
    %v637 = vshrl.u32 1326507024, %v622
    %v638 = vor.u32 %v636, %v637
    %vm639 = vcmp.lt.s32.totalorder %v620, 1
    %vm640 = vcmp.lt.s32.totalorder %v620, 2
    %vm641 = vcmp.lt.s32.totalorder %v620, 3
    %vm642 = vcmp.lt.s32.totalorder %v620, 4
    %v643 = vsel %vm639, %v623, %v626
    %v644 = vsel %vm642, %v632, 2102212464
    %v645 = vsel %vm641, %v629, %v644
    %v646 = vsel %vm640, %v643, %v645
    %v647 = vsel %vm639, %v626, %v629
    %v648 = vsel %vm642, %v635, 920167782
    %v649 = vsel %vm641, %v632, %v648
    %v650 = vsel %vm640, %v647, %v649
    %v651 = vsel %vm639, %v629, %v632
    %v652 = vsel %vm642, %v638, 1326507024
    %v653 = vsel %vm641, %v635, %v652
    %v654 = vsel %vm640, %v651, %v653
    %v655 = vshll.u32 %v615, 8
    %v656 = vmul.u32.u64.compose %v655, %v654
    %v657 = vextract.low.u32 %v656
    %v658 = vextract.high.u32 %v656
    %v659 = vmul.u32.u64.compose %v655, %v650
    %v660 = vextract.low.u32 %v659
    %v661 = vextract.high.u32 %v659
    %v662 = vmul.u32 %v655, %v646
    %v663 = vadd.s32 %v658, %v660
    %vm664 = vc.u32 %v658, %v660
    %v665 = vadd.s32 %v661, 1
    %v666 = vsel %vm664, %v665, %v661
    %v667 = vadd.s32 %v662, %v666
    %v668 = vadd.s32 %v667, 536870912
    %v669 = vshrl.u32 %v668, 30
    %v670 = vshll.u32 %v669, 30
    %v671 = vsub.s32 %v667, %v670
    %vm672 = vcmp.lt.s32.totalorder %v671, 0
    %v673 = vsub.s32 0, %v671
    %v674 = vsel %vm672, %v673, %v671
    %v675 = vclz %v674
    %v676 = vsub.s32 %v675, 2
    %vm677 = vcmp.gt.s32.totalorder 0, %v676
    %v678 = vsel %vm677, 0, %v676
    %v679 = vsub.s32 32, %v678
    %v680 = vshll.u32 %v671, %v678
    %v681 = vshrl.u32 %v663, %v679
    %v682 = vor.u32 %v680, %v681
    %v683 = vsub.s32 4294967266, %v678
    %v684 = vadd.s32 %v683, 127
    %v685 = vshll.u32 %v684, 23
    %v686 = vor.u32 4788187, %v685
    %v687 = vand.u32 2147483647, %v686
    %v689 = vcvt.s32.f32 %v682
    %v690 = vmul.f32 %v689, %v687
    %v691 = vxor.u32 %v690, 2147483648
    %v692 = vsel %vm609, %v691, %v690
    %v693 = vsub.s32 4, %v669
    %v694 = vsel %vm609, %v693, %v669
    %v695 = vsel %vm608, %v606, %v692
    %v696 = vsel %vm608, 0, %v694
    %v697 = vcosq.f32.pop %v695
    %v698 = vsinq.f32.pop %v695
    %vm699 = vweird.f32 %v606
    %v700 = vand.u32 %v696, 3
    %vm701 = vcmp.lt.s32.totalorder %v700, 2
    %vm702 = vcmp.eq.s32.totalorder %v700, 0
    %v703 = vxor.u32 %v698, 2147483648
    %v704 = vsel %vm702, %v697, %v703
    %vm705 = vcmp.eq.s32.totalorder %v700, 2
    %v706 = vxor.u32 %v697, 2147483648
    %v707 = vsel %vm705, %v706, %v698
    %v708 = vsel %vm701, %v704, %v707
    %v709 = vsel %vm699, nan, %v708
    %v710 = vstv %s603
    %v711 = vmul.f32 %v710, %v709
    %v712 = vadd.f32 %v602, %v711
    %s713 = sld [smem:[#allocation7 + $0x5]]
    %s714 = sld [smem:[#allocation3 + $0x5]]
    %v715 = vstv %s714
    %v716 = vmul.f32 %v715, %v56
    %v717 = vand.u32 2147483647, %v716
    %vm718 = vcmp.le.f32.partialorder %v717, 0.7853982
    %vm719 = vcmp.lt.s32.totalorder %v716, 0
    %v720 = vand.u32 %v716, 2139095040
    %v721 = vshrl.u32 %v720, 23
    %v722 = vsub.s32 %v721, 127
    %v723 = vand.u32 2147483647, %v716
    %v724 = vand.u32 %v723, 8388607
    %v725 = vor.u32 %v724, 8388608
    %v726 = vsub.s32 0, %v725
    %v727 = vadd.s32 %v722, 1
    %vm728 = vcmp.gt.s32.totalorder %v727, 0
    %v729 = vsel %vm728, %v727, 0
    %v730 = vshrl.u32 %v729, 5
    %v731 = vand.u32 %v729, 31
    %v732 = vsub.s32 32, %v731
    %v733 = vshrl.u32 683565275, %v732
    %v734 = vshll.u32 683565275, %v731
    %v735 = vshrl.u32 2475754826, %v732
    %v736 = vor.u32 %v734, %v735
    %v737 = vshll.u32 2475754826, %v731
    %v738 = vshrl.u32 2131351028, %v732
    %v739 = vor.u32 %v737, %v738
    %v740 = vshll.u32 2131351028, %v731
    %v741 = vshrl.u32 2102212464, %v732
    %v742 = vor.u32 %v740, %v741
    %v743 = vshll.u32 2102212464, %v731
    %v744 = vshrl.u32 920167782, %v732
    %v745 = vor.u32 %v743, %v744
    %v746 = vshll.u32 920167782, %v731
    %v747 = vshrl.u32 1326507024, %v732
    %v748 = vor.u32 %v746, %v747
    %vm749 = vcmp.lt.s32.totalorder %v730, 1
    %vm750 = vcmp.lt.s32.totalorder %v730, 2
    %vm751 = vcmp.lt.s32.totalorder %v730, 3
    %vm752 = vcmp.lt.s32.totalorder %v730, 4
    %v753 = vsel %vm749, %v733, %v736
    %v754 = vsel %vm752, %v742, 2102212464
    %v755 = vsel %vm751, %v739, %v754
    %v756 = vsel %vm750, %v753, %v755
    %v757 = vsel %vm749, %v736, %v739
    %v758 = vsel %vm752, %v745, 920167782
    %v759 = vsel %vm751, %v742, %v758
    %v760 = vsel %vm750, %v757, %v759
    %v761 = vsel %vm749, %v739, %v742
    %v762 = vsel %vm752, %v748, 1326507024
    %v763 = vsel %vm751, %v745, %v762
    %v764 = vsel %vm750, %v761, %v763
    %v765 = vshll.u32 %v725, 8
    %v766 = vmul.u32.u64.compose %v765, %v764
    %v767 = vextract.low.u32 %v766
    %v768 = vextract.high.u32 %v766
    %v769 = vmul.u32.u64.compose %v765, %v760
    %v770 = vextract.low.u32 %v769
    %v771 = vextract.high.u32 %v769
    %v772 = vmul.u32 %v765, %v756
    %v773 = vadd.s32 %v768, %v770
    %vm774 = vc.u32 %v768, %v770
    %v775 = vadd.s32 %v771, 1
    %v776 = vsel %vm774, %v775, %v771
    %v777 = vadd.s32 %v772, %v776
    %v778 = vadd.s32 %v777, 536870912
    %v779 = vshrl.u32 %v778, 30
    %v780 = vshll.u32 %v779, 30
    %v781 = vsub.s32 %v777, %v780
    %vm782 = vcmp.lt.s32.totalorder %v781, 0
    %v783 = vsub.s32 0, %v781
    %v784 = vsel %vm782, %v783, %v781
    %v785 = vclz %v784
    %v786 = vsub.s32 %v785, 2
    %vm787 = vcmp.gt.s32.totalorder 0, %v786
    %v788 = vsel %vm787, 0, %v786
    %v789 = vsub.s32 32, %v788
    %v790 = vshll.u32 %v781, %v788
    %v791 = vshrl.u32 %v773, %v789
    %v792 = vor.u32 %v790, %v791
    %v793 = vsub.s32 4294967266, %v788
    %v794 = vadd.s32 %v793, 127
    %v795 = vshll.u32 %v794, 23
    %v796 = vor.u32 4788187, %v795
    %v797 = vand.u32 2147483647, %v796
    %v799 = vcvt.s32.f32 %v792
    %v800 = vmul.f32 %v799, %v797
    %v801 = vxor.u32 %v800, 2147483648
    %v802 = vsel %vm719, %v801, %v800
    %v803 = vsub.s32 4, %v779
    %v804 = vsel %vm719, %v803, %v779
    %v805 = vsel %vm718, %v716, %v802
    %v806 = vsel %vm718, 0, %v804
    %v807 = vcosq.f32.pop %v805
    %v808 = vsinq.f32.pop %v805
    %vm809 = vweird.f32 %v716
    %v810 = vand.u32 %v806, 3
    %vm811 = vcmp.lt.s32.totalorder %v810, 2
    %vm812 = vcmp.eq.s32.totalorder %v810, 0
    %v813 = vxor.u32 %v808, 2147483648
    %v814 = vsel %vm812, %v807, %v813
    %vm815 = vcmp.eq.s32.totalorder %v810, 2
    %v816 = vxor.u32 %v807, 2147483648
    %v817 = vsel %vm815, %v816, %v808
    %v818 = vsel %vm811, %v814, %v817
    %v819 = vsel %vm809, nan, %v818
    %v820 = vstv %s713
    %v821 = vmul.f32 %v820, %v819
    %v822 = vadd.f32 %v712, %v821
    %s823 = sld [smem:[#allocation7 + $0x6]]
    %s824 = sld [smem:[#allocation3 + $0x6]]
    %v825 = vstv %s824
    %v826 = vmul.f32 %v825, %v56
    %v827 = vand.u32 2147483647, %v826
    %vm828 = vcmp.le.f32.partialorder %v827, 0.7853982
    %vm829 = vcmp.lt.s32.totalorder %v826, 0
    %v830 = vand.u32 %v826, 2139095040
    %v831 = vshrl.u32 %v830, 23
    %v832 = vsub.s32 %v831, 127
    %v833 = vand.u32 2147483647, %v826
    %v834 = vand.u32 %v833, 8388607
    %v835 = vor.u32 %v834, 8388608
    %v836 = vsub.s32 0, %v835
    %v837 = vadd.s32 %v832, 1
    %vm838 = vcmp.gt.s32.totalorder %v837, 0
    %v839 = vsel %vm838, %v837, 0
    %v840 = vshrl.u32 %v839, 5
    %v841 = vand.u32 %v839, 31
    %v842 = vsub.s32 32, %v841
    %v843 = vshrl.u32 683565275, %v842
    %v844 = vshll.u32 683565275, %v841
    %v845 = vshrl.u32 2475754826, %v842
    %v846 = vor.u32 %v844, %v845
    %v847 = vshll.u32 2475754826, %v841
    %v848 = vshrl.u32 2131351028, %v842
    %v849 = vor.u32 %v847, %v848
    %v850 = vshll.u32 2131351028, %v841
    %v851 = vshrl.u32 2102212464, %v842
    %v852 = vor.u32 %v850, %v851
    %v853 = vshll.u32 2102212464, %v841
    %v854 = vshrl.u32 920167782, %v842
    %v855 = vor.u32 %v853, %v854
    %v856 = vshll.u32 920167782, %v841
    %v857 = vshrl.u32 1326507024, %v842
    %v858 = vor.u32 %v856, %v857
    %vm859 = vcmp.lt.s32.totalorder %v840, 1
    %vm860 = vcmp.lt.s32.totalorder %v840, 2
    %vm861 = vcmp.lt.s32.totalorder %v840, 3
    %vm862 = vcmp.lt.s32.totalorder %v840, 4
    %v863 = vsel %vm859, %v843, %v846
    %v864 = vsel %vm862, %v852, 2102212464
    %v865 = vsel %vm861, %v849, %v864
    %v866 = vsel %vm860, %v863, %v865
    %v867 = vsel %vm859, %v846, %v849
    %v868 = vsel %vm862, %v855, 920167782
    %v869 = vsel %vm861, %v852, %v868
    %v870 = vsel %vm860, %v867, %v869
    %v871 = vsel %vm859, %v849, %v852
    %v872 = vsel %vm862, %v858, 1326507024
    %v873 = vsel %vm861, %v855, %v872
    %v874 = vsel %vm860, %v871, %v873
    %v875 = vshll.u32 %v835, 8
    %v876 = vmul.u32.u64.compose %v875, %v874
    %v877 = vextract.low.u32 %v876
    %v878 = vextract.high.u32 %v876
    %v879 = vmul.u32.u64.compose %v875, %v870
    %v880 = vextract.low.u32 %v879
    %v881 = vextract.high.u32 %v879
    %v882 = vmul.u32 %v875, %v866
    %v883 = vadd.s32 %v878, %v880
    %vm884 = vc.u32 %v878, %v880
    %v885 = vadd.s32 %v881, 1
    %v886 = vsel %vm884, %v885, %v881
    %v887 = vadd.s32 %v882, %v886
    %v888 = vadd.s32 %v887, 536870912
    %v889 = vshrl.u32 %v888, 30
    %v890 = vshll.u32 %v889, 30
    %v891 = vsub.s32 %v887, %v890
    %vm892 = vcmp.lt.s32.totalorder %v891, 0
    %v893 = vsub.s32 0, %v891
    %v894 = vsel %vm892, %v893, %v891
    %v895 = vclz %v894
    %v896 = vsub.s32 %v895, 2
    %vm897 = vcmp.gt.s32.totalorder 0, %v896
    %v898 = vsel %vm897, 0, %v896
    %v899 = vsub.s32 32, %v898
    %v900 = vshll.u32 %v891, %v898
    %v901 = vshrl.u32 %v883, %v899
    %v902 = vor.u32 %v900, %v901
    %v903 = vsub.s32 4294967266, %v898
    %v904 = vadd.s32 %v903, 127
    %v905 = vshll.u32 %v904, 23
    %v906 = vor.u32 4788187, %v905
    %v907 = vand.u32 2147483647, %v906
    %v909 = vcvt.s32.f32 %v902
    %v910 = vmul.f32 %v909, %v907
    %v911 = vxor.u32 %v910, 2147483648
    %v912 = vsel %vm829, %v911, %v910
    %v913 = vsub.s32 4, %v889
    %v914 = vsel %vm829, %v913, %v889
    %v915 = vsel %vm828, %v826, %v912
    %v916 = vsel %vm828, 0, %v914
    %v917 = vcosq.f32.pop %v915
    %v918 = vsinq.f32.pop %v915
    %vm919 = vweird.f32 %v826
    %v920 = vand.u32 %v916, 3
    %vm921 = vcmp.lt.s32.totalorder %v920, 2
    %vm922 = vcmp.eq.s32.totalorder %v920, 0
    %v923 = vxor.u32 %v918, 2147483648
    %v924 = vsel %vm922, %v917, %v923
    %vm925 = vcmp.eq.s32.totalorder %v920, 2
    %v926 = vxor.u32 %v917, 2147483648
    %v927 = vsel %vm925, %v926, %v918
    %v928 = vsel %vm921, %v924, %v927
    %v929 = vsel %vm919, nan, %v928
    %v930 = vstv %s823
    %v931 = vmul.f32 %v930, %v929
    %v932 = vadd.f32 %v822, %v931
    %s933 = sld [smem:[#allocation7 + $0x7]]
    %s934 = sld [smem:[#allocation3 + $0x7]]
    %v935 = vstv %s934
    %v936 = vmul.f32 %v935, %v56
    %v937 = vand.u32 2147483647, %v936
    %vm938 = vcmp.le.f32.partialorder %v937, 0.7853982
    %vm939 = vcmp.lt.s32.totalorder %v936, 0
    %v940 = vand.u32 %v936, 2139095040
    %v941 = vshrl.u32 %v940, 23
    %v942 = vsub.s32 %v941, 127
    %v943 = vand.u32 2147483647, %v936
    %v944 = vand.u32 %v943, 8388607
    %v945 = vor.u32 %v944, 8388608
    %v946 = vsub.s32 0, %v945
    %v947 = vadd.s32 %v942, 1
    %vm948 = vcmp.gt.s32.totalorder %v947, 0
    %v949 = vsel %vm948, %v947, 0
    %v950 = vshrl.u32 %v949, 5
    %v951 = vand.u32 %v949, 31
    %v952 = vsub.s32 32, %v951
    %v953 = vshrl.u32 683565275, %v952
    %v954 = vshll.u32 683565275, %v951
    %v955 = vshrl.u32 2475754826, %v952
    %v956 = vor.u32 %v954, %v955
    %v957 = vshll.u32 2475754826, %v951
    %v958 = vshrl.u32 2131351028, %v952
    %v959 = vor.u32 %v957, %v958
    %v960 = vshll.u32 2131351028, %v951
    %v961 = vshrl.u32 2102212464, %v952
    %v962 = vor.u32 %v960, %v961
    %v963 = vshll.u32 2102212464, %v951
    %v964 = vshrl.u32 920167782, %v952
    %v965 = vor.u32 %v963, %v964
    %v966 = vshll.u32 920167782, %v951
    %v967 = vshrl.u32 1326507024, %v952
    %v968 = vor.u32 %v966, %v967
    %vm969 = vcmp.lt.s32.totalorder %v950, 1
    %vm970 = vcmp.lt.s32.totalorder %v950, 2
    %vm971 = vcmp.lt.s32.totalorder %v950, 3
    %vm972 = vcmp.lt.s32.totalorder %v950, 4
    %v973 = vsel %vm969, %v953, %v956
    %v974 = vsel %vm972, %v962, 2102212464
    %v975 = vsel %vm971, %v959, %v974
    %v976 = vsel %vm970, %v973, %v975
    %v977 = vsel %vm969, %v956, %v959
    %v978 = vsel %vm972, %v965, 920167782
    %v979 = vsel %vm971, %v962, %v978
    %v980 = vsel %vm970, %v977, %v979
    %v981 = vsel %vm969, %v959, %v962
    %v982 = vsel %vm972, %v968, 1326507024
    %v983 = vsel %vm971, %v965, %v982
    %v984 = vsel %vm970, %v981, %v983
    %v985 = vshll.u32 %v945, 8
    %v986 = vmul.u32.u64.compose %v985, %v984
    %v987 = vextract.low.u32 %v986
    %v988 = vextract.high.u32 %v986
    %v989 = vmul.u32.u64.compose %v985, %v980
    %v990 = vextract.low.u32 %v989
    %v991 = vextract.high.u32 %v989
    %v992 = vmul.u32 %v985, %v976
    %v993 = vadd.s32 %v988, %v990
    %vm994 = vc.u32 %v988, %v990
    %v995 = vadd.s32 %v991, 1
    %v996 = vsel %vm994, %v995, %v991
    %v997 = vadd.s32 %v992, %v996
    %v998 = vadd.s32 %v997, 536870912
    %v999 = vshrl.u32 %v998, 30
    %v1000 = vshll.u32 %v999, 30
    %v1001 = vsub.s32 %v997, %v1000
    %vm1002 = vcmp.lt.s32.totalorder %v1001, 0
    %v1003 = vsub.s32 0, %v1001
    %v1004 = vsel %vm1002, %v1003, %v1001
    %v1005 = vclz %v1004
    %v1006 = vsub.s32 %v1005, 2
    %vm1007 = vcmp.gt.s32.totalorder 0, %v1006
    %v1008 = vsel %vm1007, 0, %v1006
    %v1009 = vsub.s32 32, %v1008
    %v1010 = vshll.u32 %v1001, %v1008
    %v1011 = vshrl.u32 %v993, %v1009
    %v1012 = vor.u32 %v1010, %v1011
    %v1013 = vsub.s32 4294967266, %v1008
    %v1014 = vadd.s32 %v1013, 127
    %v1015 = vshll.u32 %v1014, 23
    %v1016 = vor.u32 4788187, %v1015
    %v1017 = vand.u32 2147483647, %v1016
    %v1019 = vcvt.s32.f32 %v1012
    %v1020 = vmul.f32 %v1019, %v1017
    %v1021 = vxor.u32 %v1020, 2147483648
    %v1022 = vsel %vm939, %v1021, %v1020
    %v1023 = vsub.s32 4, %v999
    %v1024 = vsel %vm939, %v1023, %v999
    %v1025 = vsel %vm938, %v936, %v1022
    %v1026 = vsel %vm938, 0, %v1024
    %v1027 = vcosq.f32.pop %v1025
    %v1028 = vsinq.f32.pop %v1025
    %vm1029 = vweird.f32 %v936
    %v1030 = vand.u32 %v1026, 3
    %vm1031 = vcmp.lt.s32.totalorder %v1030, 2
    %vm1032 = vcmp.eq.s32.totalorder %v1030, 0
    %v1033 = vxor.u32 %v1028, 2147483648
    %v1034 = vsel %vm1032, %v1027, %v1033
    %vm1035 = vcmp.eq.s32.totalorder %v1030, 2
    %v1036 = vxor.u32 %v1027, 2147483648
    %v1037 = vsel %vm1035, %v1036, %v1028
    %v1038 = vsel %vm1031, %v1034, %v1037
    %v1039 = vsel %vm1029, nan, %v1038
    %v1040 = vstv %s933
    %v1041 = vmul.f32 %v1040, %v1039
    %v1042 = vadd.f32 %v932, %v1041
    %s1043 = sld [smem:[#allocation7 + $0x8]]
    %s1044 = sld [smem:[#allocation3 + $0x8]]
    %v1045 = vstv %s1044
    %v1046 = vmul.f32 %v1045, %v56
    %v1047 = vand.u32 2147483647, %v1046
    %vm1048 = vcmp.le.f32.partialorder %v1047, 0.7853982
    %vm1049 = vcmp.lt.s32.totalorder %v1046, 0
    %v1050 = vand.u32 %v1046, 2139095040
    %v1051 = vshrl.u32 %v1050, 23
    %v1052 = vsub.s32 %v1051, 127
    %v1053 = vand.u32 2147483647, %v1046
    %v1054 = vand.u32 %v1053, 8388607
    %v1055 = vor.u32 %v1054, 8388608
    %v1056 = vsub.s32 0, %v1055
    %v1057 = vadd.s32 %v1052, 1
    %vm1058 = vcmp.gt.s32.totalorder %v1057, 0
    %v1059 = vsel %vm1058, %v1057, 0
    %v1060 = vshrl.u32 %v1059, 5
    %v1061 = vand.u32 %v1059, 31
    %v1062 = vsub.s32 32, %v1061
    %v1063 = vshrl.u32 683565275, %v1062
    %v1064 = vshll.u32 683565275, %v1061
    %v1065 = vshrl.u32 2475754826, %v1062
    %v1066 = vor.u32 %v1064, %v1065
    %v1067 = vshll.u32 2475754826, %v1061
    %v1068 = vshrl.u32 2131351028, %v1062
    %v1069 = vor.u32 %v1067, %v1068
    %v1070 = vshll.u32 2131351028, %v1061
    %v1071 = vshrl.u32 2102212464, %v1062
    %v1072 = vor.u32 %v1070, %v1071
    %v1073 = vshll.u32 2102212464, %v1061
    %v1074 = vshrl.u32 920167782, %v1062
    %v1075 = vor.u32 %v1073, %v1074
    %v1076 = vshll.u32 920167782, %v1061
    %v1077 = vshrl.u32 1326507024, %v1062
    %v1078 = vor.u32 %v1076, %v1077
    %vm1079 = vcmp.lt.s32.totalorder %v1060, 1
    %vm1080 = vcmp.lt.s32.totalorder %v1060, 2
    %vm1081 = vcmp.lt.s32.totalorder %v1060, 3
    %vm1082 = vcmp.lt.s32.totalorder %v1060, 4
    %v1083 = vsel %vm1079, %v1063, %v1066
    %v1084 = vsel %vm1082, %v1072, 2102212464
    %v1085 = vsel %vm1081, %v1069, %v1084
    %v1086 = vsel %vm1080, %v1083, %v1085
    %v1087 = vsel %vm1079, %v1066, %v1069
    %v1088 = vsel %vm1082, %v1075, 920167782
    %v1089 = vsel %vm1081, %v1072, %v1088
    %v1090 = vsel %vm1080, %v1087, %v1089
    %v1091 = vsel %vm1079, %v1069, %v1072
    %v1092 = vsel %vm1082, %v1078, 1326507024
    %v1093 = vsel %vm1081, %v1075, %v1092
    %v1094 = vsel %vm1080, %v1091, %v1093
    %v1095 = vshll.u32 %v1055, 8
    %v1096 = vmul.u32.u64.compose %v1095, %v1094
    %v1097 = vextract.low.u32 %v1096
    %v1098 = vextract.high.u32 %v1096
    %v1099 = vmul.u32.u64.compose %v1095, %v1090
    %v1100 = vextract.low.u32 %v1099
    %v1101 = vextract.high.u32 %v1099
    %v1102 = vmul.u32 %v1095, %v1086
    %v1103 = vadd.s32 %v1098, %v1100
    %vm1104 = vc.u32 %v1098, %v1100
    %v1105 = vadd.s32 %v1101, 1
    %v1106 = vsel %vm1104, %v1105, %v1101
    %v1107 = vadd.s32 %v1102, %v1106
    %v1108 = vadd.s32 %v1107, 536870912
    %v1109 = vshrl.u32 %v1108, 30
    %v1110 = vshll.u32 %v1109, 30
    %v1111 = vsub.s32 %v1107, %v1110
    %vm1112 = vcmp.lt.s32.totalorder %v1111, 0
    %v1113 = vsub.s32 0, %v1111
    %v1114 = vsel %vm1112, %v1113, %v1111
    %v1115 = vclz %v1114
    %v1116 = vsub.s32 %v1115, 2
    %vm1117 = vcmp.gt.s32.totalorder 0, %v1116
    %v1118 = vsel %vm1117, 0, %v1116
    %v1119 = vsub.s32 32, %v1118
    %v1120 = vshll.u32 %v1111, %v1118
    %v1121 = vshrl.u32 %v1103, %v1119
    %v1122 = vor.u32 %v1120, %v1121
    %v1123 = vsub.s32 4294967266, %v1118
    %v1124 = vadd.s32 %v1123, 127
    %v1125 = vshll.u32 %v1124, 23
    %v1126 = vor.u32 4788187, %v1125
    %v1127 = vand.u32 2147483647, %v1126
    %v1129 = vcvt.s32.f32 %v1122
    %v1130 = vmul.f32 %v1129, %v1127
    %v1131 = vxor.u32 %v1130, 2147483648
    %v1132 = vsel %vm1049, %v1131, %v1130
    %v1133 = vsub.s32 4, %v1109
    %v1134 = vsel %vm1049, %v1133, %v1109
    %v1135 = vsel %vm1048, %v1046, %v1132
    %v1136 = vsel %vm1048, 0, %v1134
    %v1137 = vcosq.f32.pop %v1135
    %v1138 = vsinq.f32.pop %v1135
    %vm1139 = vweird.f32 %v1046
    %v1140 = vand.u32 %v1136, 3
    %vm1141 = vcmp.lt.s32.totalorder %v1140, 2
    %vm1142 = vcmp.eq.s32.totalorder %v1140, 0
    %v1143 = vxor.u32 %v1138, 2147483648
    %v1144 = vsel %vm1142, %v1137, %v1143
    %vm1145 = vcmp.eq.s32.totalorder %v1140, 2
    %v1146 = vxor.u32 %v1137, 2147483648
    %v1147 = vsel %vm1145, %v1146, %v1138
    %v1148 = vsel %vm1141, %v1144, %v1147
    %v1149 = vsel %vm1139, nan, %v1148
    %v1150 = vstv %s1043
    %v1151 = vmul.f32 %v1150, %v1149
    %v1152 = vadd.f32 %v1042, %v1151
    %s1153 = sld [smem:[#allocation7 + $0x9]]
    %s1154 = sld [smem:[#allocation3 + $0x9]]
    %v1155 = vstv %s1154
    %v1156 = vmul.f32 %v1155, %v56
    %v1157 = vand.u32 2147483647, %v1156
    %vm1158 = vcmp.le.f32.partialorder %v1157, 0.7853982
    %vm1159 = vcmp.lt.s32.totalorder %v1156, 0
    %v1160 = vand.u32 %v1156, 2139095040
    %v1161 = vshrl.u32 %v1160, 23
    %v1162 = vsub.s32 %v1161, 127
    %v1163 = vand.u32 2147483647, %v1156
    %v1164 = vand.u32 %v1163, 8388607
    %v1165 = vor.u32 %v1164, 8388608
    %v1166 = vsub.s32 0, %v1165
    %v1167 = vadd.s32 %v1162, 1
    %vm1168 = vcmp.gt.s32.totalorder %v1167, 0
    %v1169 = vsel %vm1168, %v1167, 0
    %v1170 = vshrl.u32 %v1169, 5
    %v1171 = vand.u32 %v1169, 31
    %v1172 = vsub.s32 32, %v1171
    %v1173 = vshrl.u32 683565275, %v1172
    %v1174 = vshll.u32 683565275, %v1171
    %v1175 = vshrl.u32 2475754826, %v1172
    %v1176 = vor.u32 %v1174, %v1175
    %v1177 = vshll.u32 2475754826, %v1171
    %v1178 = vshrl.u32 2131351028, %v1172
    %v1179 = vor.u32 %v1177, %v1178
    %v1180 = vshll.u32 2131351028, %v1171
    %v1181 = vshrl.u32 2102212464, %v1172
    %v1182 = vor.u32 %v1180, %v1181
    %v1183 = vshll.u32 2102212464, %v1171
    %v1184 = vshrl.u32 920167782, %v1172
    %v1185 = vor.u32 %v1183, %v1184
    %v1186 = vshll.u32 920167782, %v1171
    %v1187 = vshrl.u32 1326507024, %v1172
    %v1188 = vor.u32 %v1186, %v1187
    %vm1189 = vcmp.lt.s32.totalorder %v1170, 1
    %vm1190 = vcmp.lt.s32.totalorder %v1170, 2
    %vm1191 = vcmp.lt.s32.totalorder %v1170, 3
    %vm1192 = vcmp.lt.s32.totalorder %v1170, 4
    %v1193 = vsel %vm1189, %v1173, %v1176
    %v1194 = vsel %vm1192, %v1182, 2102212464
    %v1195 = vsel %vm1191, %v1179, %v1194
    %v1196 = vsel %vm1190, %v1193, %v1195
    %v1197 = vsel %vm1189, %v1176, %v1179
    %v1198 = vsel %vm1192, %v1185, 920167782
    %v1199 = vsel %vm1191, %v1182, %v1198
    %v1200 = vsel %vm1190, %v1197, %v1199
    %v1201 = vsel %vm1189, %v1179, %v1182
    %v1202 = vsel %vm1192, %v1188, 1326507024
    %v1203 = vsel %vm1191, %v1185, %v1202
    %v1204 = vsel %vm1190, %v1201, %v1203
    %v1205 = vshll.u32 %v1165, 8
    %v1206 = vmul.u32.u64.compose %v1205, %v1204
    %v1207 = vextract.low.u32 %v1206
    %v1208 = vextract.high.u32 %v1206
    %v1209 = vmul.u32.u64.compose %v1205, %v1200
    %v1210 = vextract.low.u32 %v1209
    %v1211 = vextract.high.u32 %v1209
    %v1212 = vmul.u32 %v1205, %v1196
    %v1213 = vadd.s32 %v1208, %v1210
    %vm1214 = vc.u32 %v1208, %v1210
    %v1215 = vadd.s32 %v1211, 1
    %v1216 = vsel %vm1214, %v1215, %v1211
    %v1217 = vadd.s32 %v1212, %v1216
    %v1218 = vadd.s32 %v1217, 536870912
    %v1219 = vshrl.u32 %v1218, 30
    %v1220 = vshll.u32 %v1219, 30
    %v1221 = vsub.s32 %v1217, %v1220
    %vm1222 = vcmp.lt.s32.totalorder %v1221, 0
    %v1223 = vsub.s32 0, %v1221
    %v1224 = vsel %vm1222, %v1223, %v1221
    %v1225 = vclz %v1224
    %v1226 = vsub.s32 %v1225, 2
    %vm1227 = vcmp.gt.s32.totalorder 0, %v1226
    %v1228 = vsel %vm1227, 0, %v1226
    %v1229 = vsub.s32 32, %v1228
    %v1230 = vshll.u32 %v1221, %v1228
    %v1231 = vshrl.u32 %v1213, %v1229
    %v1232 = vor.u32 %v1230, %v1231
    %v1233 = vsub.s32 4294967266, %v1228
    %v1234 = vadd.s32 %v1233, 127
    %v1235 = vshll.u32 %v1234, 23
    %v1236 = vor.u32 4788187, %v1235
    %v1237 = vand.u32 2147483647, %v1236
    %v1239 = vcvt.s32.f32 %v1232
    %v1240 = vmul.f32 %v1239, %v1237
    %v1241 = vxor.u32 %v1240, 2147483648
    %v1242 = vsel %vm1159, %v1241, %v1240
    %v1243 = vsub.s32 4, %v1219
    %v1244 = vsel %vm1159, %v1243, %v1219
    %v1245 = vsel %vm1158, %v1156, %v1242
    %v1246 = vsel %vm1158, 0, %v1244
    %v1247 = vcosq.f32.pop %v1245
    %v1248 = vsinq.f32.pop %v1245
    %vm1249 = vweird.f32 %v1156
    %v1250 = vand.u32 %v1246, 3
    %vm1251 = vcmp.lt.s32.totalorder %v1250, 2
    %vm1252 = vcmp.eq.s32.totalorder %v1250, 0
    %v1253 = vxor.u32 %v1248, 2147483648
    %v1254 = vsel %vm1252, %v1247, %v1253
    %vm1255 = vcmp.eq.s32.totalorder %v1250, 2
    %v1256 = vxor.u32 %v1247, 2147483648
    %v1257 = vsel %vm1255, %v1256, %v1248
    %v1258 = vsel %vm1251, %v1254, %v1257
    %v1259 = vsel %vm1249, nan, %v1258
    %v1260 = vstv %s1153
    %v1261 = vmul.f32 %v1260, %v1259
    %v1262 = vadd.f32 %v1152, %v1261
    %v1263 = vmul.f32 %v163, %v1262
    %1264 = vst [vmem:[#allocation10] sm:$0xff] %v1263
    // Predicated region
    $region30: #{tpu_custom_call.1} parent=1 // pred_check
      _
    $region31: #{tpu_custom_call.1} parent=1 // pred_check_branch
      %1266 = sbr.rel (0) target = $region33
    $region32: #{tpu_custom_call.1} parent=1 // pred_region
      %s1268 = ssub.s32 128, 128
      %1269 = vsyncadd [#allocation5], %s1268
      %s1271 = sshll.u32 [#allocation10], 4
      %s1272 = int_to_ptr.vmem [resolvable:$true] %s1271
      %1274 = dma.vmem_to_hbm [thread:$0]  %s1272, 128, %s4, [#allocation5]
    $region33: #{tpu_custom_call.1} parent=1 // pred_fallthru
      _
    // Predicated region
    $region34: #{tpu_custom_call.1} parent=1 // pred_check
      _
    $region35: #{tpu_custom_call.1} parent=1 // pred_check_branch
      %1276 = sbr.rel (0) target = $region37
    $region36: #{tpu_custom_call.1} parent=1 // pred_region
      %1277 = dma.done [#allocation5], 128
    $region37: #{tpu_custom_call.1} parent=1 // pred_fallthru
      _
    %1278 = vsyncpa [#allocation4], 1
    %1279 = vsyncpa [#allocation5], 1
    %1280 = vsyncpa [#allocation6], 1
    %1281 = vsyncpa [#allocation8], 1

</llo_original>
